<compile_context>
chip_gen: v5e
topology: v5e:2x2
jax: 0.10.0
libtpu: 0.0.40
codegen_flags: <defaults>
</compile_context>

<pallas_src>
import functools

import jax
import jax.numpy as jnp
from jax.experimental import pallas as pl
from jax.experimental.pallas import tpu as pltpu


LANE = 128
SUB = 8


def _round_up(x, m):
    return ((x + m - 1) // m) * m


def coattention_kernel(src_ref, seq_ref, wq_ref, bq_ref, wkv_ref, bkv_ref,
                       wo_ref, bo_ref, out_ref,
                       q_sc, m_sc, l_sc, acc_sc, mask_sc,
                       *, scale, seq_len, seq_padded):
    s_idx = pl.program_id(1)
    TB, TS, D = seq_ref.shape
    Dp = out_ref.shape[1]

    # ---- per batch-block init (first seq tile only) --------------------------------
    @pl.when(s_idx == 0)
    def _init():
        q = jnp.dot(src_ref[...], wq_ref[...],
                    preferred_element_type=jnp.float32) + bq_ref[...]        # [TB, Dp]
        q_sc[...] = q * scale                    # fold softmax scale into q once
        m_sc[...] = jnp.full((TB, 1), -jnp.inf, jnp.float32)
        l_sc[...] = jnp.zeros((TB, 1), jnp.float32)
        acc_sc[...] = jnp.zeros((TB, Dp), jnp.float32)

        # Block-diagonal structure is invariant along the seq axis: build once, reuse.
        row = jax.lax.broadcasted_iota(jnp.int32, (TB, TB * TS), 0)
        col = jax.lax.broadcasted_iota(jnp.int32, (TB, TB * TS), 1)
        on_diag = (col >= row * TS) & (col < row * TS + TS)
        if seq_padded:
            # store within-sequence column index; off-diagonal -> huge (always invalid)
            loc = (col - row * TS).astype(jnp.float32)
            mask_sc[...] = jnp.where(on_diag, loc, 3e38)
        else:
            mask_sc[...] = jnp.where(on_diag, 0.0, -1e30)

    # ---- fused K/V projection on the MXU (bf16 inputs, f32 accumulation) -----------
    # Per batch-row slab to avoid a packed-bf16 (TB, TS, D)->(TB*TS, D) reshape.
    kv = jnp.concatenate(
        [jnp.dot(seq_ref[b], wkv_ref[...], preferred_element_type=jnp.float32)
         for b in range(TB)],
        axis=0) + bkv_ref[...]                                               # [TB*TS, 2Dp]
    k = kv[:, :Dp]
    v = kv[:, Dp:]

    # ---- scores on the MXU, masked down to the block diagonal ----------------------
    scores = jax.lax.dot_general(
        q_sc[...], k, dimension_numbers=(((1,), (1,)), ((), ())),
        preferred_element_type=jnp.float32)                                  # [TB, TB*TS]
    if seq_padded:
        # one fused select covers both off-diagonal and seq-tail padding
        j_global = mask_sc[...] + (s_idx * TS).astype(jnp.float32)
        scores = jnp.where(j_global < seq_len, scores, -1e30)
    else:
        scores = scores + mask_sc[...]           # additive 0 / -1e30 bias, no selects

    # ---- online (flash-style) softmax accumulation across the seq axis -------------
    m_prev = m_sc[...]
    m_new = jnp.maximum(m_prev, jnp.max(scores, axis=-1, keepdims=True))     # [TB, 1]
    alpha = jnp.exp(m_prev - m_new)
    p = jnp.exp(scores - m_new)                  # masked entries -> exp(-huge) == 0
    l_sc[...] = alpha * l_sc[...] + jnp.sum(p, axis=-1, keepdims=True)
    acc_sc[...] = alpha * acc_sc[...] + jnp.dot(p, v,
                                                preferred_element_type=jnp.float32)
    m_sc[...] = m_new

    # ---- finalize: normalize + output projection ------------------------------------
    @pl.when(s_idx == pl.num_programs(1) - 1)
    def _finalize():
        # l >= 1 for every row (the -1e30 sentinel keeps even padded rows finite).
        l = l_sc[...]
        inv = pl.reciprocal(l, approx=True)      # EUP slot
        inv = inv * (2.0 - l * inv)              # one Newton step -> ~f32 precision
        ctx = acc_sc[...] * inv                                              # [TB, Dp]
        out_ref[...] = (jnp.dot(ctx, wo_ref[...].astype(jnp.float32),
                                preferred_element_type=jnp.float32) + bo_ref[...])


def coattention_forward(src, seq, params, *, block_s=512, block_b=8):
    B, D = src.shape
    _, S, _ = seq.shape
    scale = float(D // 8) ** -0.5          # heads = 8, dim_head = D // 8 (integer)

    Dp = _round_up(D, LANE)                # lane-padded width for projection outputs

    # Batch tile: never pad tiny batches (keeps the dominant seq stream at native size).
    if B <= SUB:
        TB = B
    else:
        TB = min(_round_up(block_b, SUB), _round_up(B, SUB))
    Bp = _round_up(B, TB)

    # Seq tile: large tiles amortize per-step overhead; multiple of 8 sublanes.
    TS = min(_round_up(S, SUB), _round_up(block_s, SUB))
    Sp = _round_up(S, TS)
    seq_padded = (Sp != S)

    f32, bf16 = jnp.float32, jnp.bfloat16

    def padw(x, rows, cols):
        x = x.astype(f32)
        return jnp.pad(x, ((0, rows - x.shape[0]), (0, cols - x.shape[1])))

    # Big streams keep native feature width D; cast to bf16 at the boundary
    # (no-op bytes-wise if the producer already emits bf16 / fuses under jit).
    src_p = jnp.pad(src, ((0, Bp - B), (0, 0))).astype(bf16)
    seq_p = jnp.pad(seq, ((0, Bp - B), (0, Sp - S), (0, 0))).astype(bf16)

    # Small weights: pad only the output feature dim to a lane multiple; biases stay f32.
    wq_p = padw(params["wq"], D, Dp).astype(bf16)
    bq_p = padw(params["bq"], 1, Dp)
    wkv_p = jnp.concatenate([padw(params["wk"], D, Dp),
                             padw(params["wv"], D, Dp)], axis=1).astype(bf16)
    bkv_p = jnp.concatenate([padw(params["bk"], 1, Dp),
                             padw(params["bv"], 1, Dp)], axis=1)
    wo_p = padw(params["wo"], Dp, Dp).astype(bf16)
    bo_p = padw(params["bo"], 1, Dp)

    grid = (Bp // TB, Sp // TS)
    kernel = functools.partial(coattention_kernel, scale=scale, seq_len=S,
                               seq_padded=seq_padded)

    def _const(shape):
        # Grid-invariant operand: constant index_map + single-buffered (saves VMEM).
        return pl.BlockSpec(shape, lambda b, s: (0, 0), pipeline_mode=pl.Buffered(1))

    out_p = pl.pallas_call(
        kernel,
        out_shape=jax.ShapeDtypeStruct((Bp, Dp), f32),
        grid_spec=pltpu.PrefetchScalarGridSpec(
            num_scalar_prefetch=0,
            grid=grid,
            in_specs=[
                pl.BlockSpec((TB, D), lambda b, s: (b, 0)),           # src (per batch block)
                pl.BlockSpec((TB, TS, D), lambda b, s: (b, s, 0)),    # seq (streamed tiles)
                _const((D, Dp)),                                      # wq
                _const((1, Dp)),                                      # bq
                _const((D, 2 * Dp)),                                  # wkv (fused K/V)
                _const((1, 2 * Dp)),                                  # bkv
                _const((Dp, Dp)),                                     # wo
                _const((1, Dp)),                                      # bo
            ],
            out_specs=pl.BlockSpec((TB, Dp), lambda b, s: (b, 0)),    # resident across s
            scratch_shapes=[
                pltpu.VMEM((TB, Dp), f32),        # pre-scaled q
                pltpu.VMEM((TB, 1), f32),         # running max
                pltpu.VMEM((TB, 1), f32),         # running denominator
                pltpu.VMEM((TB, Dp), f32),        # running numerator
                pltpu.VMEM((TB, TB * TS), f32),   # block-diag mask / local column index
            ],
        ),
        compiler_params=pltpu.CompilerParams(
            dimension_semantics=("parallel", "arbitrary"),
            vmem_limit_bytes=32 * 1024 * 1024,
        ),
    )(src_p, seq_p, wq_p, bq_p, wkv_p, bkv_p, wo_p, bo_p)

    return out_p[:B, :D]


def reference_forward(src, seq, params):
    D = src.shape[-1]
    scale = float(D // 8) ** -0.5
    q = src @ params["wq"] + params["bq"]
    k = seq @ params["wk"] + params["bk"]
    v = seq @ params["wv"] + params["bv"]
    dots = jnp.einsum("bd,bjd->bj", q, k) * scale
    attn = jax.nn.softmax(dots, axis=-1)
    out = jnp.einsum("bj,bjd->bd", attn, v)
    return out @ params["wo"] + params["bo"]


def make_params(key, dims):
    # Xavier-normal weights (deterministic via PRNGKey); biases small uniform.
    ks = jax.random.split(key, 6)

    def xavier(k, fan_in, fan_out, shape):
        std = (2.0 / (fan_in + fan_out)) ** 0.5
        return (jax.random.normal(k, shape, jnp.float32) * std).astype(jnp.float32)

    wq = xavier(ks[0], dims, dims, (dims, dims))          # stored as [in, out]
    wkv = xavier(ks[1], dims, 2 * dims, (dims, 2 * dims))
    wo = xavier(ks[2], dims, dims, (dims, dims))
    bnd = 1.0 / (dims ** 0.5)
    bq = jax.random.uniform(ks[3], (1, dims), jnp.float32, -bnd, bnd)
    bkv = jax.random.uniform(ks[4], (1, 2 * dims), jnp.float32, -bnd, bnd)
    bo = jax.random.uniform(ks[5], (1, dims), jnp.float32, -bnd, bnd)
    return {
        "wq": wq, "bq": bq,
        "wk": wkv[:, :dims], "bk": bkv[:, :dims],
        "wv": wkv[:, dims:], "bv": bkv[:, dims:],
        "wo": wo, "bo": bo,
    }


if __name__ == "__main__":
    B, S, D = 2, 8, 32   # dims=32, heads=8 -> dim_head=4, scale=0.5

    key = jax.random.PRNGKey(0)
    k_param, k_src, k_seq = jax.random.split(key, 3)
    params = make_params(k_param, D)
    src = jax.random.normal(k_src, (B, D), jnp.float32)
    seq = jax.random.normal(k_seq, (B, S, D), jnp.float32)

    out = jax.jit(coattention_forward)(src, seq, params)
    out = jax.block_until_ready(out)

    # Reference on bf16-rounded inputs (the kernel streams seq/weights in bf16 but
    # accumulates in f32), so the comparison isolates genuine kernel errors.
    rt = lambda x: x.astype(jnp.bfloat16).astype(jnp.float32)
    ref_params = {k: (rt(v) if k in ("wq", "wk", "wv", "wo") else v)
                  for k, v in params.items()}
    ref = reference_forward(rt(src), rt(seq), ref_params)

    assert out.shape == (B, D)
    assert jnp.allclose(out, ref, atol=3e-2, rtol=3e-2), "Pallas output mismatch vs reference"

    print("KERNEL_OK")
</pallas_src>

<mosaic_0001>
module attributes {stable_mosaic.version = 11 : i64} {
  func.func @coattention_kernel(%arg0: i32, %arg1: i32, %arg2: memref<2x32xbf16, #tpu.memory_space<vmem>>, %arg3: memref<2x8x32xbf16, #tpu.memory_space<vmem>>, %arg4: memref<32x128xbf16, #tpu.memory_space<vmem>>, %arg5: memref<1x128xf32, #tpu.memory_space<vmem>>, %arg6: memref<32x256xbf16, #tpu.memory_space<vmem>>, %arg7: memref<1x256xf32, #tpu.memory_space<vmem>>, %arg8: memref<128x128xbf16, #tpu.memory_space<vmem>>, %arg9: memref<1x128xf32, #tpu.memory_space<vmem>>, %arg10: memref<2x128xf32, #tpu.memory_space<vmem>>, %arg11: memref<2x128xf32, #tpu.memory_space<vmem>>, %arg12: memref<2x1xf32, #tpu.memory_space<vmem>>, %arg13: memref<2x1xf32, #tpu.memory_space<vmem>>, %arg14: memref<2x128xf32, #tpu.memory_space<vmem>>, %arg15: memref<2x16xf32, #tpu.memory_space<vmem>>) attributes {dimension_semantics = [#tpu.dimension_semantics<parallel>, #tpu.dimension_semantics<arbitrary>], iteration_bounds = array<i64: 1, 1>, scalar_prefetch = 0 : i64, scratch_operands = 5 : i64, tpu.core_type = #tpu.core_type<tc>, window_params = [{transform_indices = @transform_0, window_bounds = array<i64: 2, 32>}, {transform_indices = @transform_1, window_bounds = array<i64: 2, 8, 32>}, {pipeline_mode = #tpu.pipeline_mode<synchronous>, transform_indices = @transform_2, window_bounds = array<i64: 32, 128>}, {pipeline_mode = #tpu.pipeline_mode<synchronous>, transform_indices = @transform_3, window_bounds = array<i64: 1, 128>}, {pipeline_mode = #tpu.pipeline_mode<synchronous>, transform_indices = @transform_4, window_bounds = array<i64: 32, 256>}, {pipeline_mode = #tpu.pipeline_mode<synchronous>, transform_indices = @transform_5, window_bounds = array<i64: 1, 256>}, {pipeline_mode = #tpu.pipeline_mode<synchronous>, transform_indices = @transform_6, window_bounds = array<i64: 128, 128>}, {pipeline_mode = #tpu.pipeline_mode<synchronous>, transform_indices = @transform_7, window_bounds = array<i64: 1, 128>}, {transform_indices = @transform_8, window_bounds = array<i64: 2, 128>}]} {
    %c0_i32 = arith.constant 0 : i32
    %0 = arith.cmpi eq, %arg1, %c0_i32 : i32
    %1 = arith.extui %0 : i1 to i32
    %c0_i32_0 = arith.constant 0 : i32
    %2 = arith.cmpi ne, %1, %c0_i32_0 : i32
    scf.if %2 {
      %c0_34 = arith.constant 0 : index
      %c0_35 = arith.constant 0 : index
      %46 = vector.load %arg2[%c0_34, %c0_35] : memref<2x32xbf16, #tpu.memory_space<vmem>>, vector<2x32xbf16>
      %c0_36 = arith.constant 0 : index
      %c0_37 = arith.constant 0 : index
      %47 = vector.load %arg4[%c0_36, %c0_37] : memref<32x128xbf16, #tpu.memory_space<vmem>>, vector<32x128xbf16>
      %cst_38 = arith.constant dense<0.000000e+00> : vector<2x128xf32>
      %48 = tpu.matmul %46, %47, %cst_38 {dimension_numbers = #tpu.dot_dimension_numbers<[1], [0], [0], [1], [0, 0, 1, 1], [], []>} : vector<2x32xbf16>, vector<32x128xbf16>, vector<2x128xf32> -> vector<2x128xf32>
      %c0_39 = arith.constant 0 : index
      %c0_40 = arith.constant 0 : index
      %49 = vector.load %arg5[%c0_39, %c0_40] : memref<1x128xf32, #tpu.memory_space<vmem>>, vector<1x128xf32>
      %50 = vector.broadcast %49 : vector<1x128xf32> to vector<2x128xf32>
      %51 = arith.addf %48, %50 : vector<2x128xf32>
      %cst_41 = arith.constant 5.000000e-01 : f32
      %52 = vector.broadcast %cst_41 : f32 to vector<2x128xf32>
      %53 = arith.mulf %51, %52 : vector<2x128xf32>
      %c0_42 = arith.constant 0 : index
      %c0_43 = arith.constant 0 : index
      %54 = vector.load %arg11[%c0_42, %c0_43] : memref<2x128xf32, #tpu.memory_space<vmem>>, vector<2x128xf32>
      tpu.vector_store %arg11[%c0_42, %c0_43], %53 {strides = array<i32>} : memref<2x128xf32, #tpu.memory_space<vmem>>, vector<2x128xf32>,
      %cst_44 = arith.constant 0xFF800000 : f32
      %55 = vector.broadcast %cst_44 : f32 to vector<2x1xf32>
      %c0_45 = arith.constant 0 : index
      %c0_46 = arith.constant 0 : index
      %56 = vector.load %arg12[%c0_45, %c0_46] : memref<2x1xf32, #tpu.memory_space<vmem>>, vector<2x1xf32>
      tpu.vector_store %arg12[%c0_45, %c0_46], %55 {strides = array<i32>} : memref<2x1xf32, #tpu.memory_space<vmem>>, vector<2x1xf32>,
      %cst_47 = arith.constant 0.000000e+00 : f32
      %57 = vector.broadcast %cst_47 : f32 to vector<2x1xf32>
      %c0_48 = arith.constant 0 : index
      %c0_49 = arith.constant 0 : index
      %58 = vector.load %arg13[%c0_48, %c0_49] : memref<2x1xf32, #tpu.memory_space<vmem>>, vector<2x1xf32>
      tpu.vector_store %arg13[%c0_48, %c0_49], %57 {strides = array<i32>} : memref<2x1xf32, #tpu.memory_space<vmem>>, vector<2x1xf32>,
      %cst_50 = arith.constant 0.000000e+00 : f32
      %59 = vector.broadcast %cst_50 : f32 to vector<2x128xf32>
      %c0_51 = arith.constant 0 : index
      %c0_52 = arith.constant 0 : index
      %60 = vector.load %arg14[%c0_51, %c0_52] : memref<2x128xf32, #tpu.memory_space<vmem>>, vector<2x128xf32>
      tpu.vector_store %arg14[%c0_51, %c0_52], %59 {strides = array<i32>} : memref<2x128xf32, #tpu.memory_space<vmem>>, vector<2x128xf32>,
      %61 = tpu.iota {dimensions = array<i32: 0>} : vector<2x16xi32>
      %62 = tpu.iota {dimensions = array<i32: 1>} : vector<2x16xi32>
      %c8_i32 = arith.constant 8 : i32
      %63 = vector.broadcast %c8_i32 : i32 to vector<2x16xi32>
      %64 = arith.muli %61, %63 : vector<2x16xi32>
      %65 = arith.cmpi sge, %62, %64 : vector<2x16xi32>
      %c8_i32_53 = arith.constant 8 : i32
      %66 = vector.broadcast %c8_i32_53 : i32 to vector<2x16xi32>
      %67 = arith.muli %61, %66 : vector<2x16xi32>
      %c8_i32_54 = arith.constant 8 : i32
      %68 = vector.broadcast %c8_i32_54 : i32 to vector<2x16xi32>
      %69 = arith.addi %67, %68 : vector<2x16xi32>
      %70 = arith.cmpi slt, %62, %69 : vector<2x16xi32>
      %71 = arith.andi %65, %70 : vector<2x16xi1>
      %cst_55 = arith.constant 0.000000e+00 : f32
      %cst_56 = arith.constant -1.000000e+30 : f32
      %72 = vector.broadcast %cst_55 : f32 to vector<2x16xf32>
      %73 = vector.broadcast %cst_56 : f32 to vector<2x16xf32>
      %74 = arith.select %71, %72, %73 : vector<2x16xi1>, vector<2x16xf32>
      %c0_57 = arith.constant 0 : index
      %c0_58 = arith.constant 0 : index
      %75 = vector.load %arg15[%c0_57, %c0_58] : memref<2x16xf32, #tpu.memory_space<vmem>>, vector<2x16xf32>
      tpu.vector_store %arg15[%c0_57, %c0_58], %74 {strides = array<i32>} : memref<2x16xf32, #tpu.memory_space<vmem>>, vector<2x16xf32>,
    } else {
    }
    %c0 = arith.constant 0 : index
    %c0_1 = arith.constant 0 : index
    %c0_2 = arith.constant 0 : index
    %3 = vector.load %arg3[%c0, %c0_1, %c0_2] : memref<2x8x32xbf16, #tpu.memory_space<vmem>>, vector<1x8x32xbf16>
    %4 = vector.shape_cast %3 : vector<1x8x32xbf16> to vector<8x32xbf16>
    %c0_3 = arith.constant 0 : index
    %c0_4 = arith.constant 0 : index
    %5 = vector.load %arg6[%c0_3, %c0_4] : memref<32x256xbf16, #tpu.memory_space<vmem>>, vector<32x256xbf16>
    %cst = arith.constant dense<0.000000e+00> : vector<8x256xf32>
    %6 = tpu.matmul %4, %5, %cst {dimension_numbers = #tpu.dot_dimension_numbers<[1], [0], [0], [1], [0, 0, 1, 1], [], []>} : vector<8x32xbf16>, vector<32x256xbf16>, vector<8x256xf32> -> vector<8x256xf32>
    %c1 = arith.constant 1 : index
    %c0_5 = arith.constant 0 : index
    %c0_6 = arith.constant 0 : index
    %7 = vector.load %arg3[%c1, %c0_5, %c0_6] : memref<2x8x32xbf16, #tpu.memory_space<vmem>>, vector<1x8x32xbf16>
    %8 = vector.shape_cast %7 : vector<1x8x32xbf16> to vector<8x32xbf16>
    %c0_7 = arith.constant 0 : index
    %c0_8 = arith.constant 0 : index
    %9 = vector.load %arg6[%c0_7, %c0_8] : memref<32x256xbf16, #tpu.memory_space<vmem>>, vector<32x256xbf16>
    %cst_9 = arith.constant dense<0.000000e+00> : vector<8x256xf32>
    %10 = tpu.matmul %8, %9, %cst_9 {dimension_numbers = #tpu.dot_dimension_numbers<[1], [0], [0], [1], [0, 0, 1, 1], [], []>} : vector<8x32xbf16>, vector<32x256xbf16>, vector<8x256xf32> -> vector<8x256xf32>
    %11 = tpu.concatenate %6, %10 in 0 : vector<8x256xf32>, vector<8x256xf32> -> vector<16x256xf32>
    %c0_10 = arith.constant 0 : index
    %c0_11 = arith.constant 0 : index
    %12 = vector.load %arg7[%c0_10, %c0_11] : memref<1x256xf32, #tpu.memory_space<vmem>>, vector<1x256xf32>
    %13 = vector.broadcast %12 : vector<1x256xf32> to vector<16x256xf32>
    %14 = arith.addf %11, %13 : vector<16x256xf32>
    %15 = vector.extract_strided_slice %14 {offsets = [0, 0], sizes = [16, 128], strides = [1, 1]} : vector<16x256xf32> to vector<16x128xf32>
    %16 = vector.extract_strided_slice %14 {offsets = [0, 128], sizes = [16, 128], strides = [1, 1]} : vector<16x256xf32> to vector<16x128xf32>
    %c0_12 = arith.constant 0 : index
    %c0_13 = arith.constant 0 : index
    %17 = vector.load %arg11[%c0_12, %c0_13] : memref<2x128xf32, #tpu.memory_space<vmem>>, vector<2x128xf32>
    %cst_14 = arith.constant dense<0.000000e+00> : vector<2x16xf32>
    %18 = tpu.matmul %17, %15, %cst_14 {dimension_numbers = #tpu.dot_dimension_numbers<[1], [1], [0], [0], [0, 0, 1, 0], [], []>} : vector<2x128xf32>, vector<16x128xf32>, vector<2x16xf32> -> vector<2x16xf32>
    %c0_15 = arith.constant 0 : index
    %c0_16 = arith.constant 0 : index
    %19 = vector.load %arg15[%c0_15, %c0_16] : memref<2x16xf32, #tpu.memory_space<vmem>>, vector<2x16xf32>
    %20 = arith.addf %18, %19 : vector<2x16xf32>
    %c0_17 = arith.constant 0 : index
    %c0_18 = arith.constant 0 : index
    %21 = vector.load %arg12[%c0_17, %c0_18] : memref<2x1xf32, #tpu.memory_space<vmem>>, vector<2x1xf32>
    %cst_19 = arith.constant dense<0xFF800000> : vector<2xf32>
    %22 = vector.multi_reduction <maximumf>, %20, %cst_19 [1] : vector<2x16xf32> to vector<2xf32>
    %23 = vector.shape_cast %22 : vector<2xf32> to vector<2x1xf32>
    %24 = arith.maximumf %21, %23 : vector<2x1xf32>
    %25 = arith.subf %21, %24 : vector<2x1xf32>
    %26 = math.exp %25 : vector<2x1xf32>
    %27 = vector.broadcast %24 : vector<2x1xf32> to vector<2x16xf32>
    %28 = arith.subf %20, %27 : vector<2x16xf32>
    %29 = math.exp %28 : vector<2x16xf32>
    %c0_20 = arith.constant 0 : index
    %c0_21 = arith.constant 0 : index
    %30 = vector.load %arg13[%c0_20, %c0_21] : memref<2x1xf32, #tpu.memory_space<vmem>>, vector<2x1xf32>
    %31 = arith.mulf %26, %30 : vector<2x1xf32>
    %cst_22 = arith.constant dense<0.000000e+00> : vector<2xf32>
    %32 = vector.multi_reduction <add>, %29, %cst_22 [1] : vector<2x16xf32> to vector<2xf32>
    %33 = vector.shape_cast %32 : vector<2xf32> to vector<2x1xf32>
    %34 = arith.addf %31, %33 : vector<2x1xf32>
    %c0_23 = arith.constant 0 : index
    %c0_24 = arith.constant 0 : index
    %35 = vector.load %arg13[%c0_23, %c0_24] : memref<2x1xf32, #tpu.memory_space<vmem>>, vector<2x1xf32>
    tpu.vector_store %arg13[%c0_23, %c0_24], %34 {strides = array<i32>} : memref<2x1xf32, #tpu.memory_space<vmem>>, vector<2x1xf32>,
    %c0_25 = arith.constant 0 : index
    %c0_26 = arith.constant 0 : index
    %36 = vector.load %arg14[%c0_25, %c0_26] : memref<2x128xf32, #tpu.memory_space<vmem>>, vector<2x128xf32>
    %37 = vector.broadcast %26 : vector<2x1xf32> to vector<2x128xf32>
    %38 = arith.mulf %37, %36 : vector<2x128xf32>
    %cst_27 = arith.constant dense<0.000000e+00> : vector<2x128xf32>
    %39 = tpu.matmul %29, %16, %cst_27 {dimension_numbers = #tpu.dot_dimension_numbers<[1], [0], [0], [1], [0, 0, 1, 1], [], []>} : vector<2x16xf32>, vector<16x128xf32>, vector<2x128xf32> -> vector<2x128xf32>
    %40 = arith.addf %38, %39 : vector<2x128xf32>
    %c0_28 = arith.constant 0 : index
    %c0_29 = arith.constant 0 : index
    %41 = vector.load %arg14[%c0_28, %c0_29] : memref<2x128xf32, #tpu.memory_space<vmem>>, vector<2x128xf32>
    tpu.vector_store %arg14[%c0_28, %c0_29], %40 {strides = array<i32>} : memref<2x128xf32, #tpu.memory_space<vmem>>, vector<2x128xf32>,
    %c0_30 = arith.constant 0 : index
    %c0_31 = arith.constant 0 : index
    %42 = vector.load %arg12[%c0_30, %c0_31] : memref<2x1xf32, #tpu.memory_space<vmem>>, vector<2x1xf32>
    tpu.vector_store %arg12[%c0_30, %c0_31], %24 {strides = array<i32>} : memref<2x1xf32, #tpu.memory_space<vmem>>, vector<2x1xf32>,
    %c0_i32_32 = arith.constant 0 : i32
    %43 = arith.cmpi eq, %arg1, %c0_i32_32 : i32
    %44 = arith.extui %43 : i1 to i32
    %c0_i32_33 = arith.constant 0 : i32
    %45 = arith.cmpi ne, %44, %c0_i32_33 : i32
    scf.if %45 {
      %c0_34 = arith.constant 0 : index
      %c0_35 = arith.constant 0 : index
      %46 = vector.load %arg13[%c0_34, %c0_35] : memref<2x1xf32, #tpu.memory_space<vmem>>, vector<2x1xf32>
      %47 = tpu.reciprocal %46 {approx = true} : vector<2x1xf32> -> vector<2x1xf32>
      %48 = arith.mulf %46, %47 : vector<2x1xf32>
      %cst_36 = arith.constant 2.000000e+00 : f32
      %49 = vector.broadcast %cst_36 : f32 to vector<2x1xf32>
      %50 = arith.subf %49, %48 : vector<2x1xf32>
      %51 = arith.mulf %47, %50 : vector<2x1xf32>
      %c0_37 = arith.constant 0 : index
      %c0_38 = arith.constant 0 : index
      %52 = vector.load %arg14[%c0_37, %c0_38] : memref<2x128xf32, #tpu.memory_space<vmem>>, vector<2x128xf32>
      %53 = vector.broadcast %51 : vector<2x1xf32> to vector<2x128xf32>
      %54 = arith.mulf %52, %53 : vector<2x128xf32>
      %c0_39 = arith.constant 0 : index
      %c0_40 = arith.constant 0 : index
      %55 = vector.load %arg8[%c0_39, %c0_40] : memref<128x128xbf16, #tpu.memory_space<vmem>>, vector<128x128xbf16>
      %56 = arith.extf %55 : vector<128x128xbf16> to vector<128x128xf32>
      %cst_41 = arith.constant dense<0.000000e+00> : vector<2x128xf32>
      %57 = tpu.matmul %54, %56, %cst_41 {dimension_numbers = #tpu.dot_dimension_numbers<[1], [0], [0], [1], [0, 0, 1, 1], [], []>} : vector<2x128xf32>, vector<128x128xf32>, vector<2x128xf32> -> vector<2x128xf32>
      %c0_42 = arith.constant 0 : index
      %c0_43 = arith.constant 0 : index
      %58 = vector.load %arg9[%c0_42, %c0_43] : memref<1x128xf32, #tpu.memory_space<vmem>>, vector<1x128xf32>
      %59 = vector.broadcast %58 : vector<1x128xf32> to vector<2x128xf32>
      %60 = arith.addf %57, %59 : vector<2x128xf32>
      %c0_44 = arith.constant 0 : index
      %c0_45 = arith.constant 0 : index
      %61 = vector.load %arg10[%c0_44, %c0_45] : memref<2x128xf32, #tpu.memory_space<vmem>>, vector<2x128xf32>
      tpu.vector_store %arg10[%c0_44, %c0_45], %60 {strides = array<i32>} : memref<2x128xf32, #tpu.memory_space<vmem>>, vector<2x128xf32>,
    } else {
    }
    return
  }
  func.func @transform_0(%arg0: i32, %arg1: i32) -> (i32, i32) {
    %c0_i32 = arith.constant 0 : i32
    %c0_i32_0 = arith.constant 0 : i32
    return %arg0, %c0_i32 : i32, i32
  }
  func.func @transform_1(%arg0: i32, %arg1: i32) -> (i32, i32, i32) {
    %c0_i32 = arith.constant 0 : i32
    %c0_i32_0 = arith.constant 0 : i32
    return %arg0, %arg1, %c0_i32 : i32, i32, i32
  }
  func.func @transform_2(%arg0: i32, %arg1: i32) -> (i32, i32) {
    %c0_i32 = arith.constant 0 : i32
    %c0_i32_0 = arith.constant 0 : i32
    %c0_i32_1 = arith.constant 0 : i32
    return %c0_i32, %c0_i32_0 : i32, i32
  }
  func.func @transform_3(%arg0: i32, %arg1: i32) -> (i32, i32) {
    %c0_i32 = arith.constant 0 : i32
    %c0_i32_0 = arith.constant 0 : i32
    %c0_i32_1 = arith.constant 0 : i32
    return %c0_i32, %c0_i32_0 : i32, i32
  }
  func.func @transform_4(%arg0: i32, %arg1: i32) -> (i32, i32) {
    %c0_i32 = arith.constant 0 : i32
    %c0_i32_0 = arith.constant 0 : i32
    %c0_i32_1 = arith.constant 0 : i32
    return %c0_i32, %c0_i32_0 : i32, i32
  }
  func.func @transform_5(%arg0: i32, %arg1: i32) -> (i32, i32) {
    %c0_i32 = arith.constant 0 : i32
    %c0_i32_0 = arith.constant 0 : i32
    %c0_i32_1 = arith.constant 0 : i32
    return %c0_i32, %c0_i32_0 : i32, i32
  }
  func.func @transform_6(%arg0: i32, %arg1: i32) -> (i32, i32) {
    %c0_i32 = arith.constant 0 : i32
    %c0_i32_0 = arith.constant 0 : i32
    %c0_i32_1 = arith.constant 0 : i32
    return %c0_i32, %c0_i32_0 : i32, i32
  }
  func.func @transform_7(%arg0: i32, %arg1: i32) -> (i32, i32) {
    %c0_i32 = arith.constant 0 : i32
    %c0_i32_0 = arith.constant 0 : i32
    %c0_i32_1 = arith.constant 0 : i32
    return %c0_i32, %c0_i32_0 : i32, i32
  }
  func.func @transform_8(%arg0: i32, %arg1: i32) -> (i32, i32) {
    %c0_i32 = arith.constant 0 : i32
    %c0_i32_0 = arith.constant 0 : i32
    return %arg0, %c0_i32 : i32, i32
  }
}

</mosaic_0001>

<llo_original>
// kernel: coattention_forward.1
$region0: #{coattention_forward.1}
  #allocation0 [shape = 'u32[]', space=smem, size = 0x4, offset = 0x4, fixed_abs, tag = 'smem constant byte address 0x4 - core index']
  #allocation1 [shape = 'u32[72,128]{1,0:T(1,128)}', space=vmem, size = 0x9000, scoped, tag = 'internal scratch']
  #allocation2 [shape = 'f32[2,128]{1,0:T(2,128)}', space=vmem, size = 0x400, scoped, tag = 'scratch operand']
  #allocation3 [shape = 'f32[2,1]{1,0:T(2,128)}', space=vmem, size = 0x400, scoped, tag = 'scratch operand']
  #allocation4 [shape = 'f32[2,1]{1,0:T(2,128)}', space=vmem, size = 0x400, scoped, tag = 'scratch operand']
  #allocation5 [shape = 'f32[2,128]{1,0:T(2,128)}', space=vmem, size = 0x400, scoped, tag = 'scratch operand']
  #allocation6 [shape = 'f32[2,16]{1,0:T(2,128)}', space=vmem, size = 0x400, scoped, tag = 'scratch operand']
  %s0 = inlined_call_operand.vmem [shape: bf16[2,32], index: 0, kind: input, shape index: {}]
  %s1 = inlined_call_operand.vmem [shape: bf16[2,8,32], index: 1, kind: input, shape index: {}]
  %s2 = inlined_call_operand.vmem [shape: bf16[32,128], index: 2, kind: input, shape index: {}]
  %s3 = inlined_call_operand.vmem [shape: f32[1,128], index: 3, kind: input, shape index: {}]
  %s4 = inlined_call_operand.vmem [shape: bf16[32,256], index: 4, kind: input, shape index: {}]
  %s5 = inlined_call_operand.vmem [shape: f32[1,256], index: 5, kind: input, shape index: {}]
  %s6 = inlined_call_operand.vmem [shape: bf16[128,128], index: 6, kind: input, shape index: {}]
  %s7 = inlined_call_operand.vmem [shape: f32[1,128], index: 7, kind: input, shape index: {}]
  %s8 = inlined_call_operand.hbm [shape: f32[2,128], index: 8, kind: output, shape index: {}]
  %s9 = sld [smem:[#allocation0]]
  $region50: #{coattention_forward.1} parent=0
    _
  %s11 = ssub.s32 1, %s9
  %s12 = scalar_select 0, %s11, %s9
  $region1: #{coattention_forward.1} parent=0
    #allocation7 [shape = 'u8[1024]{0}', space=vmem, size = 0x400, scoped, tag = 'output window, operand 0, single buffered']
    #allocation8 [shape = 's32[1]{0}', space=sflag, size = 0x4, scoped, tag = 'scoped memory for coattention_forward.1']
    %13 = vsyncpa [#allocation8], 0
    // Predicated region
    $region2: #{coattention_forward.1} parent=1 // pred_check
      _
    $region3: #{coattention_forward.1} parent=1 // pred_check_branch
      %15 = sbr.rel (0) target = $region5
    $region4: #{coattention_forward.1} parent=1 // pred_region
      _
    $region5: #{coattention_forward.1} parent=1 // pred_fallthru
      _
    // Predicated region
    $region6: #{coattention_forward.1} parent=1 // pred_check
      _
    $region7: #{coattention_forward.1} parent=1 // pred_check_branch
      %17 = sbr.rel (0) target = $region9
    $region8: #{coattention_forward.1} parent=1 // pred_region
      _
    $region9: #{coattention_forward.1} parent=1 // pred_fallthru
      _
    // Predicated region
    $region10: #{coattention_forward.1} parent=1 // pred_check
      _
    $region11: #{coattention_forward.1} parent=1 // pred_check_branch
      %19 = sbr.rel (0) target = $region13
    $region12: #{coattention_forward.1} parent=1 // pred_region
      _
    $region13: #{coattention_forward.1} parent=1 // pred_fallthru
      _
    // Predicated region
    $region14: #{coattention_forward.1} parent=1 // pred_check
      _
    $region15: #{coattention_forward.1} parent=1 // pred_check_branch
      %21 = sbr.rel (0) target = $region17
    $region16: #{coattention_forward.1} parent=1 // pred_region
      _
    $region17: #{coattention_forward.1} parent=1 // pred_fallthru
      _
    // Predicated region
    $region18: #{coattention_forward.1} parent=1 // pred_check
      _
    $region19: #{coattention_forward.1} parent=1 // pred_check_branch
      %23 = sbr.rel (0) target = $region21
    $region20: #{coattention_forward.1} parent=1 // pred_region
      _
    $region21: #{coattention_forward.1} parent=1 // pred_fallthru
      _
    // Predicated region
    $region22: #{coattention_forward.1} parent=1 // pred_check
      _
    $region23: #{coattention_forward.1} parent=1 // pred_check_branch
      %25 = sbr.rel (0) target = $region25
    $region24: #{coattention_forward.1} parent=1 // pred_region
      _
    $region25: #{coattention_forward.1} parent=1 // pred_fallthru
      _
    // Predicated region
    $region26: #{coattention_forward.1} parent=1 // pred_check
      _
    $region27: #{coattention_forward.1} parent=1 // pred_check_branch
      %27 = sbr.rel (0) target = $region29
    $region28: #{coattention_forward.1} parent=1 // pred_region
      _
    $region29: #{coattention_forward.1} parent=1 // pred_fallthru
      _
    // Predicated region
    $region30: #{coattention_forward.1} parent=1 // pred_check
      _
    $region31: #{coattention_forward.1} parent=1 // pred_check_branch
      %29 = sbr.rel (0) target = $region33
    $region32: #{coattention_forward.1} parent=1 // pred_region
      _
    $region33: #{coattention_forward.1} parent=1 // pred_fallthru
      _
    %p31 = scmp.eq.s32.totalorder 0, 0
    // Predicated region
    $region34: #{coattention_forward.1} parent=1 // pred_check
      %p32 = pneg %p31
    $region35: #{coattention_forward.1} parent=1 // pred_check_branch
      %34 = sbr.rel (%p32) target = $region37
    $region36: #{coattention_forward.1} parent=1 // pred_region
      %v35 = vld [vmem:[%s0] sm:$0x1]
      %v36 = vld [vmem:[%s2] sm:$0xf]
      %v37 = vld [vmem:[%s2 + $0x4] sm:$0xf]
      %v38 = vld [vmem:[%s2 + $0x8] sm:$0xf]
      %v39 = vld [vmem:[%s2 + $0xc] sm:$0xf]
      %v40 = vld [vmem:[%s3] sm:$0x1]
      %v42 = vperm.slane %v40, 0
      %v48 = vunpack.c.l.b16 %v36
      %v49 = vunpack.c.l.b16 %v37
      %v50 = vunpack.c.l.b16 %v38
      %v51 = vunpack.c.l.b16 %v39
      %v52 = vpack.c.b16 %v49, %v48
      %v53 = vpack.c.b16 %v51, %v50
      %vm56 = vcmask 261120
      %v58 = vsel %vm56, %v35, 0
      %60 = vmatpush.bf16.msra.mxu0 0
      %61 = vmatpush.bf16.msra.mxu0 0
      %62 = vmatpush.bf16.msra.mxu0 0
      %63 = vmatpush.bf16.msra.mxu0 0
      %64 = vmatpush.bf16.msra.mxu0 0
      %65 = vmatpush.bf16.msra.mxu0 0
      %66 = vmatpush.bf16.msra.mxu0 %v53
      %67 = vmatpush.bf16.msra.mxu0 %v52
      %68 = vmatmul.bf16.gmra.mxu0 %v58
      %v69 = vpop.f32.mrf.mxu0
      %v70 = vadd.f32 %v42, %v69
      %v71 = vpop.f32.mrf.mxu0
      %72 = vdwg.mxu0
      %v73 = vmul.f32 %v70, 0.5
      %74 = vst [vmem:[#allocation2] sm:$0x3] %v73
      %vm75 = vcmask 1024
      %76 = vst.msk [vmem:[#allocation3] sm:$0x3] %vm75, -inf
      %77 = vst.msk [vmem:[#allocation4] sm:$0x3] %vm75, 0.0
      %78 = vst [vmem:[#allocation5] sm:$0x3] 0.0
      %v79 = vlaneseq
      %v80 = vshrl.u32 %v79, 7
      %v81 = vlaneseq
      %v82 = vand.u32 %v81, 127
      %v83 = vmul.u32 %v80, 8
      %vm84 = vcmp.ge.s32.totalorder %v82, %v83
      %v85 = vadd.s32 %v83, 8
      %vm86 = vcmp.lt.s32.totalorder %v82, %v85
      %vm87 = vmand %vm84, %vm86
      %v88 = vsel %vm87, 0.0, -1e+30
      %vm89 = vcmask 123904
      %90 = vst.msk [vmem:[#allocation6] sm:$0x3] %vm89, %v88
    $region37: #{coattention_forward.1} parent=1 // pred_fallthru
      _
    %v91 = vld [vmem:[%s1] sm:$0xf]
    %v92 = vld [vmem:[%s4] sm:$0xff]
    %v93 = vld [vmem:[%s4 + $0x8] sm:$0xff]
    %v94 = vld [vmem:[%s4 + $0x10] sm:$0xff]
    %v95 = vld [vmem:[%s4 + $0x18] sm:$0xff]
    %v100 = vunpack.c.l.b16 %v92
    %v101 = vunpack.c.h.b16 %v92
    %v102 = vunpack.c.l.b16 %v93
    %v103 = vunpack.c.h.b16 %v93
    %v104 = vunpack.c.l.b16 %v94
    %v105 = vunpack.c.h.b16 %v94
    %v106 = vunpack.c.l.b16 %v95
    %v107 = vunpack.c.h.b16 %v95
    %v108 = vpack.c.b16 %v102, %v100
    %v109 = vpack.c.b16 %v103, %v101
    %v110 = vpack.c.b16 %v106, %v104
    %v111 = vpack.c.b16 %v107, %v105
    %vm116 = vcmask 261120
    %v118 = vsel %vm116, %v91, 0
    %120 = vmatpush.bf16.msra.mxu0 0
    %121 = vmatpush.bf16.msra.mxu0 0
    %122 = vmatpush.bf16.msra.mxu0 0
    %123 = vmatpush.bf16.msra.mxu0 0
    %124 = vmatpush.bf16.msra.mxu0 0
    %125 = vmatpush.bf16.msra.mxu0 0
    %126 = vmatpush.bf16.msra.mxu0 %v110
    %127 = vmatpush.bf16.msra.mxu0 %v108
    %128 = vmatmul.bf16.gmra.mxu0 %v118
    %v129 = vpop.f32.mrf.mxu0
    %v130 = vadd.f32 0.0, %v129
    %v131 = vpop.f32.mrf.mxu0
    %132 = vdwg.mxu0
    %133 = vmatpush.bf16.msra.mxu0 0
    %134 = vmatpush.bf16.msra.mxu0 0
    %135 = vmatpush.bf16.msra.mxu0 0
    %136 = vmatpush.bf16.msra.mxu0 0
    %137 = vmatpush.bf16.msra.mxu0 0
    %138 = vmatpush.bf16.msra.mxu0 0
    %139 = vmatpush.bf16.msra.mxu0 %v111
    %140 = vmatpush.bf16.msra.mxu0 %v109
    %141 = vmatmul.bf16.gmra.mxu0 %v118
    %v142 = vpop.f32.mrf.mxu0
    %v143 = vadd.f32 0.0, %v142
    %v144 = vpop.f32.mrf.mxu0
    %145 = vdwg.mxu0
    %s146 = scalar_lea.vmem %s1, 4
    %v147 = vld [vmem:[%s146] sm:$0xf]
    %v149 = vsel %vm116, %v147, 0
    %151 = vmatpush.bf16.msra.mxu0 0
    %152 = vmatpush.bf16.msra.mxu0 0
    %153 = vmatpush.bf16.msra.mxu0 0
    %154 = vmatpush.bf16.msra.mxu0 0
    %155 = vmatpush.bf16.msra.mxu0 0
    %156 = vmatpush.bf16.msra.mxu0 0
    %157 = vmatpush.bf16.msra.mxu0 %v110
    %158 = vmatpush.bf16.msra.mxu0 %v108
    %159 = vmatmul.bf16.gmra.mxu0 %v149
    %v160 = vpop.f32.mrf.mxu0
    %v161 = vadd.f32 0.0, %v160
    %v162 = vpop.f32.mrf.mxu0
    %163 = vdwg.mxu0
    %164 = vmatpush.bf16.msra.mxu0 0
    %165 = vmatpush.bf16.msra.mxu0 0
    %166 = vmatpush.bf16.msra.mxu0 0
    %167 = vmatpush.bf16.msra.mxu0 0
    %168 = vmatpush.bf16.msra.mxu0 0
    %169 = vmatpush.bf16.msra.mxu0 0
    %170 = vmatpush.bf16.msra.mxu0 %v111
    %171 = vmatpush.bf16.msra.mxu0 %v109
    %172 = vmatmul.bf16.gmra.mxu0 %v149
    %v173 = vpop.f32.mrf.mxu0
    %v174 = vadd.f32 0.0, %v173
    %v175 = vpop.f32.mrf.mxu0
    %176 = vdwg.mxu0
    %v177 = vld [vmem:[%s5] sm:$0x3]
    %v179 = vperm.slane %v177, 0
    %v180 = vperm.slane %v177, 1
    %v183 = vadd.f32 %v130, %v179
    %v184 = vadd.f32 %v143, %v180
    %v185 = vadd.f32 %v161, %v179
    %v186 = vadd.f32 %v174, %v180
    %v187 = vld [vmem:[#allocation2] sm:$0x3]
    %v188 = vld [vmem:[#allocation6] sm:$0x3]
    %189 = vmatpush.xpose.msra.mxu0 0.0
    %190 = vmatpush.xpose.msra.mxu0 0.0
    %191 = vmatpush.xpose.msra.mxu0 0.0
    %192 = vmatpush.xpose.msra.mxu0 0.0
    %193 = vmatpush.xpose.msra.mxu0 0.0
    %194 = vmatpush.xpose.msra.mxu0 0.0
    %195 = vmatpush.xpose.msra.mxu0 0.0
    %196 = vmatpush.xpose.msra.mxu0 0.0
    %197 = vmatpush.xpose.msra.mxu0 0.0
    %198 = vmatpush.xpose.msra.mxu0 0.0
    %199 = vmatpush.xpose.msra.mxu0 0.0
    %200 = vmatpush.xpose.msra.mxu0 0.0
    %201 = vmatpush.xpose.msra.mxu0 0.0
    %202 = vmatpush.xpose.msra.mxu0 0.0
    %203 = vmatpush.xpose.msra.mxu0 %v185
    %204 = vmatpush.xpose.msra.mxu0 %v183
    %205 = vmatmul.f32.gmra.mxu0 %v187
    %v206 = vpop.f32.mrf.mxu0
    %v207 = vadd.f32 %v188, %v206
    %208 = vdwg.mxu0
    %v209 = vld [vmem:[#allocation3] sm:$0x3]
    %vm210 = vcmask 123904
    %v211 = vsel %vm210, %v207, -inf
    %212 = vmax.xlane.f32.xlu0 %v211
    %v213 = vpop.xlane.xlu0 %212
    %v214 = vmax.f32 %v209, %v213
    %v215 = vsub.f32 %v209, %v214
    %v216 = vmul.f32 %v215, 1.442695
    %v217 = vpow.pop %v216
    %219 = vset.pattern.permute.xlu0 0
    %220 = vperm.xlu0 %219, %v214
    %v221 = vpop.permute.xlu0 %220
    %v223 = vsub.f32 %v207, %v221
    %v224 = vmul.f32 %v223, 1.442695
    %v225 = vpow.pop %v224
    %v226 = vld [vmem:[#allocation4] sm:$0x3]
    %v227 = vmul.f32 %v217, %v226
    %v228 = vsel %vm210, %v225, 0.0
    %229 = vadd.xlane.f32.xlu0 %v228
    %v230 = vpop.xlane.xlu0 %229
    %v231 = vadd.f32 %v227, %v230
    %vm232 = vcmask 1024
    %233 = vst.msk [vmem:[#allocation4] sm:$0x3] %vm232, %v231
    %v234 = vld [vmem:[#allocation5] sm:$0x3]
    %236 = vset.pattern.permute.xlu0 0
    %237 = vperm.xlu0 %236, %v217
    %v238 = vpop.permute.xlu0 %237
    %v240 = vmul.f32 %v238, %v234
    %vm241 = vcmask 130048
    %v243 = vsel %vm241, %v225, 0
    %245 = vmatpush.msra.mxu0 0.0
    %246 = vmatpush.msra.mxu0 0.0
    %247 = vmatpush.msra.mxu0 0.0
    %248 = vmatpush.msra.mxu0 0.0
    %249 = vmatpush.msra.mxu0 0.0
    %250 = vmatpush.msra.mxu0 0.0
    %251 = vmatpush.msra.mxu0 0.0
    %252 = vmatpush.msra.mxu0 0.0
    %253 = vmatpush.msra.mxu0 0.0
    %254 = vmatpush.msra.mxu0 0.0
    %255 = vmatpush.msra.mxu0 0.0
    %256 = vmatpush.msra.mxu0 0.0
    %257 = vmatpush.msra.mxu0 0.0
    %258 = vmatpush.msra.mxu0 0.0
    %259 = vmatpush.msra.mxu0 %v186
    %260 = vmatpush.msra.mxu0 %v184
    %261 = vmatmul.f32.gmra.mxu0 %v243
    %v262 = vpop.f32.mrf.mxu0
    %v263 = vadd.f32 0.0, %v262
    %264 = vdwg.mxu0
    %v265 = vadd.f32 %v240, %v263
    %266 = vst [vmem:[#allocation5] sm:$0x3] %v265
    %267 = vst.msk [vmem:[#allocation3] sm:$0x3] %vm232, %v214
    // Predicated region
    $region38: #{coattention_forward.1} parent=1 // pred_check
      %p268 = pneg %p31
    $region39: #{coattention_forward.1} parent=1 // pred_check_branch
      %270 = sbr.rel (%p268) target = $region41
    $region40: #{coattention_forward.1} parent=1 // pred_region
      %v271 = vld [vmem:[#allocation4] sm:$0x3]
      %v272 = vrcp.pop %v271
      %v273 = vmul.f32 %v271, %v272
      %v274 = vsub.f32 2.0, %v273
      %v275 = vmul.f32 %v272, %v274
      %v276 = vld [vmem:[#allocation5] sm:$0x3]
      %278 = vset.pattern.permute.xlu0 0
      %279 = vperm.xlu0 %278, %v275
      %v280 = vpop.permute.xlu0 %279
      %v282 = vmul.f32 %v276, %v280
      %v283 = vld [vmem:[%s6] sm:$0xf]
      %v284 = vld [vmem:[%s6 + $0x4] sm:$0xf]
      %v285 = vld [vmem:[%s6 + $0x8] sm:$0xf]
      %v286 = vld [vmem:[%s6 + $0xc] sm:$0xf]
      %v287 = vld [vmem:[%s6 + $0x10] sm:$0xf]
      %v288 = vld [vmem:[%s6 + $0x14] sm:$0xf]
      %v289 = vld [vmem:[%s6 + $0x18] sm:$0xf]
      %v290 = vld [vmem:[%s6 + $0x1c] sm:$0xf]
      %v291 = vld [vmem:[%s6 + $0x20] sm:$0xf]
      %v292 = vld [vmem:[%s6 + $0x24] sm:$0xf]
      %v293 = vld [vmem:[%s6 + $0x28] sm:$0xf]
      %v294 = vld [vmem:[%s6 + $0x2c] sm:$0xf]
      %v295 = vld [vmem:[%s6 + $0x30] sm:$0xf]
      %v296 = vld [vmem:[%s6 + $0x34] sm:$0xf]
      %v297 = vld [vmem:[%s6 + $0x38] sm:$0xf]
      %v298 = vld [vmem:[%s6 + $0x3c] sm:$0xf]
      %v299 = vunpack.c.l.bf16 %v283
      %v300 = vunpack.c.l.bf16 %v284
      %v301 = vunpack.c.l.bf16 %v285
      %v302 = vunpack.c.l.bf16 %v286
      %v303 = vunpack.c.l.bf16 %v287
      %v304 = vunpack.c.l.bf16 %v288
      %v305 = vunpack.c.l.bf16 %v289
      %v306 = vunpack.c.l.bf16 %v290
      %v307 = vunpack.c.l.bf16 %v291
      %v308 = vunpack.c.l.bf16 %v292
      %v309 = vunpack.c.l.bf16 %v293
      %v310 = vunpack.c.l.bf16 %v294
      %v311 = vunpack.c.l.bf16 %v295
      %v312 = vunpack.c.l.bf16 %v296
      %v313 = vunpack.c.l.bf16 %v297
      %v314 = vunpack.c.l.bf16 %v298
      %v315 = vld [vmem:[%s7] sm:$0x1]
      %v317 = vperm.slane %v315, 0
      %319 = vmatpush.msra.mxu0 %v314
      %320 = vmatpush.msra.mxu0 %v313
      %321 = vmatpush.msra.mxu0 %v312
      %322 = vmatpush.msra.mxu0 %v311
      %323 = vmatpush.msra.mxu0 %v310
      %324 = vmatpush.msra.mxu0 %v309
      %325 = vmatpush.msra.mxu0 %v308
      %326 = vmatpush.msra.mxu0 %v307
      %327 = vmatpush.msra.mxu0 %v306
      %328 = vmatpush.msra.mxu0 %v305
      %329 = vmatpush.msra.mxu0 %v304
      %330 = vmatpush.msra.mxu0 %v303
      %331 = vmatpush.msra.mxu0 %v302
      %332 = vmatpush.msra.mxu0 %v301
      %333 = vmatpush.msra.mxu0 %v300
      %334 = vmatpush.msra.mxu0 %v299
      %335 = vmatmul.f32.gmra.mxu0 %v282
      %v336 = vpop.f32.mrf.mxu0
      %v337 = vadd.f32 %v317, %v336
      %338 = vdwg.mxu0
      %339 = vst [vmem:[#allocation7] sm:$0x3] %v337
    $region41: #{coattention_forward.1} parent=1 // pred_fallthru
      _
    // Predicated region
    $region42: #{coattention_forward.1} parent=1 // pred_check
      _
    $region43: #{coattention_forward.1} parent=1 // pred_check_branch
      %341 = sbr.rel (0) target = $region45
    $region44: #{coattention_forward.1} parent=1 // pred_region
      %343 = vsyncadd [#allocation8], 0
      %s345 = sshll.u32 [#allocation7], 4
      %s346 = int_to_ptr.vmem [resolvable:$true] %s345
      %s347 = sshll.u32 %s8, 4
      %s348 = int_to_ptr.hbm [resolvable:$true] %s347
      %350 = dma.vmem_to_hbm [thread:$0]  %s346, 32, %s348, [#allocation8]
    $region45: #{coattention_forward.1} parent=1 // pred_fallthru
      _
    // Predicated region
    $region46: #{coattention_forward.1} parent=1 // pred_check
      _
    $region47: #{coattention_forward.1} parent=1 // pred_check_branch
      %352 = sbr.rel (0) target = $region49
    $region48: #{coattention_forward.1} parent=1 // pred_region
      %354 = dma.done [#allocation8], 32
    $region49: #{coattention_forward.1} parent=1 // pred_fallthru
      _
    %355 = vsyncpa [#allocation8], 1

</llo_original>
